<compile_context>
chip_gen: v5e
topology: v5e:2x2
jax: 0.10.0
libtpu: 0.0.40
codegen_flags: <defaults>
</compile_context>

<pallas_src>
import functools

import jax
import jax.numpy as jnp
from jax.experimental import pallas as pl
from jax.experimental.pallas import tpu as pltpu


# Only bother splitting into concurrent DMAs above this size; below it a
# single DMA is already launch-overhead-free and at DMA-engine bandwidth.
_CHUNK_MIN_BYTES = 4 * 1024 * 1024


@functools.lru_cache(maxsize=None)
def _make_dma_copy_kernel(n_chunks, chunk_rows):
    """Kernel: whole-array (or chunked-concurrent) HBM->HBM DMA copy."""

    if n_chunks == 1:
        def kernel(x_ref, o_ref, sem):
            cp = pltpu.make_async_copy(x_ref, o_ref, sem)
            cp.start()
            cp.wait()
        return kernel

    def kernel(x_ref, o_ref, sem):
        copies = []
        for i in range(n_chunks):                       # static Python loop
            src = x_ref.at[pl.ds(i * chunk_rows, chunk_rows)]
            dst = o_ref.at[pl.ds(i * chunk_rows, chunk_rows)]
            cp = pltpu.make_async_copy(src, dst, sem.at[i])
            cp.start()                                   # all in flight
            copies.append(cp)
        for cp in copies:                                # then drain
            cp.wait()
    return kernel


def _choose_chunks(shape, nbytes):
    """Pick 1/2/4 concurrent DMAs along the leading dim (static decision)."""
    if len(shape) == 0 or nbytes < _CHUNK_MIN_BYTES:
        return 1
    for n in (4, 2):
        if shape[0] >= n and shape[0] % n == 0:
            return n
    return 1


def _pallas_identity_copy(x):
    """Materialize a fresh copy of `x` via a direct HBM->HBM DMA."""
    x = jnp.asarray(x)
    if x.ndim == 0 or x.size == 0:
        return x

    nbytes = x.size * jnp.dtype(x.dtype).itemsize
    n_chunks = _choose_chunks(x.shape, nbytes)
    chunk_rows = x.shape[0] // n_chunks if n_chunks > 1 else 0
    kernel = _make_dma_copy_kernel(n_chunks, chunk_rows)

    sem_shape = () if n_chunks == 1 else (n_chunks,)
    return pl.pallas_call(
        kernel,
        out_shape=jax.ShapeDtypeStruct(x.shape, x.dtype),
        in_specs=[pl.BlockSpec(memory_space=pl.ANY)],   # raw HBM ref in
        out_specs=pl.BlockSpec(memory_space=pl.ANY),    # raw HBM ref out
        scratch_shapes=[pltpu.SemaphoreType.DMA(sem_shape)],
    )(x)


# jit caches per (shape, dtype) so repeated calls don't retrace; the reshapes
# and dispatch around the copy are fused/free under jit.
_identity_copy_jit = jax.jit(_pallas_identity_copy)


class IdentityAugmentor:
    """Identity augmenter: forward(**kwargs) returns {k: v for k, v in kwargs}.

    By default this is a pure pass-through (exact identity, zero HBM traffic).
    Set force_copy=True to route array kwargs through the Pallas HBM->HBM DMA
    copy kernel (fresh buffers, for benchmarking / aliasing-sensitive callers).
    """

    def __init__(self, force_copy=False, **kwargs):
        self.force_copy = force_copy

    def forward(self, **kwargs):
        if not self.force_copy:
            # Identity is exact; no copy can beat zero work.
            return {k: v for k, v in kwargs.items()}
        out = {}
        for k, v in kwargs.items():
            if isinstance(v, (jnp.ndarray, jax.Array)) and v.size > 0 and v.ndim > 0:
                out[k] = _identity_copy_jit(v)
            else:
                out[k] = v  # non-array / scalar / empty kwargs pass through
        return out

    __call__ = forward


if __name__ == "__main__":
    key = jax.random.PRNGKey(0)
    k1, k2, k3, k4 = jax.random.split(key, 4)

    # Deterministic small example inputs (graph-ish kwargs + an NCHW tensor).
    x = jax.random.normal(k1, (2, 4, 16, 16), dtype=jnp.float32)
    node_feats = jax.random.normal(k2, (8, 32), dtype=jnp.float32)
    hidden_bf16 = jax.random.normal(k3, (8, 32), dtype=jnp.bfloat16)
    edge_index = jax.random.randint(k4, (2, 16), 0, 8, dtype=jnp.int32)

    # 1) Default path: pure pass-through (the real IdentityAugmentor behavior).
    aug = IdentityAugmentor()
    out = aug(x=x, node_feats=node_feats, hidden_bf16=hidden_bf16,
              edge_index=edge_index, scale=2.5)
    assert out["x"] is x and out["node_feats"] is node_feats
    assert out["edge_index"] is edge_index and out["scale"] == 2.5

    # 2) Forced-copy path: exercise the Pallas HBM->HBM DMA kernel once.
    aug_copy = IdentityAugmentor(force_copy=True)
    out_c = aug_copy(x=x, node_feats=node_feats, hidden_bf16=hidden_bf16,
                     edge_index=edge_index)
    for v in out_c.values():
        jax.block_until_ready(v)

    # Verify exact identity semantics (shape, dtype, values) on both paths.
    assert out_c["x"].shape == x.shape and out_c["x"].dtype == x.dtype
    assert out_c["node_feats"].shape == node_feats.shape
    assert out_c["node_feats"].dtype == node_feats.dtype
    assert out_c["hidden_bf16"].dtype == hidden_bf16.dtype
    assert out_c["edge_index"].dtype == edge_index.dtype
    assert jnp.array_equal(out_c["x"], x)
    assert jnp.array_equal(out_c["node_feats"], node_feats)
    assert jnp.array_equal(out_c["hidden_bf16"], hidden_bf16)
    assert jnp.array_equal(out_c["edge_index"], edge_index)
    assert jnp.array_equal(out["x"], x)

    print("KERNEL_OK")
</pallas_src>

<mosaic_0001>
module attributes {stable_mosaic.version = 11 : i64} {
  func.func @kernel(%arg0: memref<2x4x16x16xf32, #tpu.memory_space<any>>, %arg1: memref<2x4x16x16xf32, #tpu.memory_space<any>>, %arg2: memref<!tpu.dma_semaphore, #tpu.memory_space<semaphore_mem>>) attributes {dimension_semantics = [], scalar_prefetch = 0 : i64, scratch_operands = 1 : i64, tpu.core_type = #tpu.core_type<tc>} {
    tpu.enqueue_dma source(%arg0 : memref<2x4x16x16xf32, #tpu.memory_space<any>>) target(%arg1 : memref<2x4x16x16xf32, #tpu.memory_space<any>>) target_semaphore(%arg2 : memref<!tpu.dma_semaphore, #tpu.memory_space<semaphore_mem>>)
    tpu.wait_dma2 semaphore(%arg2 : memref<!tpu.dma_semaphore, #tpu.memory_space<semaphore_mem>>) src(%arg0 : memref<2x4x16x16xf32, #tpu.memory_space<any>>) dst(%arg1 : memref<2x4x16x16xf32, #tpu.memory_space<any>>)
    return
  }
}

</mosaic_0001>

<llo_original>
// kernel: _pallas_identity_copy.1
$region0: #{_pallas_identity_copy.1}
  #allocation0 [shape = 'u32[]', space=smem, size = 0x4, offset = 0x4, fixed_abs, tag = 'smem constant byte address 0x4 - core index']
  #allocation1 [shape = 'u32[72,128]{1,0:T(1,128)}', space=vmem, size = 0x9000, scoped, tag = 'internal scratch']
  #allocation2 [shape = 's32[1]{0}', space=sflag, size = 0x4, scoped, tag = 'scratch operand']
  #allocation3 [shape = 's32[]', space=sflag, size = 0x4, offset = 0, fixed_abs, tag = 'sflag constant byte address 0x0 - dummy sync flag']
  #allocation4 [shape = 'u32[0]{0}', space=smem, size = 0, offset = 0, fixed_abs, tag = 'smem constant byte address 0x0 - null']
  %s0 = inlined_call_operand.hbm [shape: f32[2,4,16,16], index: 0, kind: input, shape index: {}]
  %s1 = inlined_call_operand.hbm [shape: f32[2,4,16,16], index: 1, kind: output, shape index: {}]
  %s2 = sld [smem:[#allocation0]]
  $region2: #{_pallas_identity_copy.1} parent=0
    _
  %s4 = ssub.s32 1, %s2
  %s5 = scalar_select 0, %s4, %s2
  %s7 = sshll.u32 1, 14
  %s8 = sxor.u32 4294967295, %s7
  %s10 = sshll.u32 %s0, 4
  %s11 = int_to_ptr.hbm [resolvable:$true] %s10
  %s12 = sshll.u32 %s1, 4
  %s13 = int_to_ptr.hbm [resolvable:$true] %s12
  %16 = dma.general %s11, 2048, %s13, [#allocation2], [#allocation3], [#allocation4], 0, 0
  %s17 = smul.u32 2, 4
  %s18 = smul.u32 %s17, 16
  %s19 = smul.u32 %s18, 1
  %s20 = sshll.u32 %s19, 4
  %21 = dma.done [#allocation2], %s20
  %22 = vsyncmov [#allocation2]
  %s23 = vpop.sfrf %22
  %p24 = scmp.eq.s32.totalorder %s23, 0
  %p25 = pneg %p24
  %27 = shalt.err (%p25)

</llo_original>
